<compile_context>
chip_gen: v7x
topology: tpu7x:2x2x1
jax: 0.10.0
libtpu: 0.0.40
codegen_flags: <defaults>
</compile_context>

<pallas_src>
import math
from functools import partial

import jax
import jax.numpy as jnp
import numpy as np
from jax.experimental import pallas as pl
from jax.experimental.pallas import tpu as pltpu

# ----------------------------- config ---------------------------------------
B = 2            # batch
S = 8            # sequence length
D = 32           # hidden size
H = 4            # number of heads
HD = D // H      # head dim
I = 64           # MLP intermediate size
EPS = 1e-6       # RMSNorm eps
N = B * S        # flattened rows (batch folded into sublanes)

QKVP = 4 * D             # padded fused-QKV width (q|k|v|zero-pad) = 128 lanes
GU_OFF = QKVP            # gate/up offset in w_pack (lane-tile aligned)
WO_OFF = QKVP + 2 * I    # o-proj offset in w_pack
WTOT = WO_OFF + D        # total packed-weight lanes = 288
AROWS = max(I, H * N)    # rows of the packed attention-constants buffer


# ----------------------------- kernel ---------------------------------------
def decoder_layer_kernel(x_ref, rope_ref, attn_ref, w_ref, out_ref, *,
                         approx_recip=True):
    x = x_ref[...]                                             # (N, D) f32

    # ---- input RMSNorm (gain folded into the QKV weight rows) ----
    xn = x * jax.lax.rsqrt(jnp.mean(x * x, axis=-1, keepdims=True) + EPS)

    # ---- fused QKV projection, padded to 128 lanes (one MXU push) ----
    qkv = jnp.dot(xn, w_ref[:, 0:QKVP],
                  preferred_element_type=jnp.float32)          # (N, 4D)

    # ---- RoPE on q and k lanes at once (v / pad lanes: cos=1, sin=0) ----
    # The two full-width lane rolls wrap across head / projection boundaries;
    # sina/sinb are zero on every lane where a wrapped (wrong) value lands:
    # first-half-of-head lanes read j+HD//2 and second-half lanes read j-HD//2,
    # both of which stay inside the same head (see assert in build_constants).
    cos = rope_ref[0:N, :]
    sina = rope_ref[N:2 * N, :]
    sinb = rope_ref[2 * N:3 * N, :]
    qkv = (qkv * cos
           + pltpu.roll(qkv, shift=QKVP - HD // 2, axis=1) * sina   # j + HD//2
           + pltpu.roll(qkv, shift=HD // 2, axis=1) * sinb)         # j - HD//2

    q = qkv[:, 0:D]
    k = qkv[:, D:2 * D]
    v = qkv[:, 2 * D:3 * D]

    # ---- head-batched attention (all H heads stacked along sublanes) ----
    headmask = attn_ref[0:H * N, D:2 * D]                      # (H*N, D) 0/1
    amask = attn_ref[0:H * N, 2 * D:2 * D + N]                 # (H*N, N) additive
    # Replicate Q per head and zero the other heads' lanes so a single MXU
    # push produces the sublane-stacked (H*N, N) score block.  The 1/sqrt(HD)
    # scale is already folded into the Q weight columns.
    q_rep = jnp.concatenate([q] * H, axis=0) * headmask        # (H*N, D)
    s = jax.lax.dot_general(q_rep, k, (((1,), (1,)), ((), ())),
                            preferred_element_type=jnp.float32)  # (H*N, N)
    s = s + amask
    s = s - jnp.max(s, axis=-1, keepdims=True)
    p = jnp.exp(s)
    denom = jnp.sum(p, axis=-1, keepdims=True)                 # >= 1 after max-sub
    if approx_recip:
        p = p * pl.reciprocal(denom, approx=True)              # EUP slot
    else:
        p = p / denom                                          # exact (test path)

    # One PV matmul for all heads; recombine heads with a lane mask + adds
    # (no lane concatenate, no per-head VMEM scratch writeback).
    attn_stack = jnp.dot(p, v, preferred_element_type=jnp.float32) * headmask
    attn = attn_stack[0:N]
    for h in range(1, H):
        attn = attn + attn_stack[h * N:(h + 1) * N]            # (N, D)

    o = jnp.dot(attn, w_ref[:, WO_OFF:WO_OFF + D],
                preferred_element_type=jnp.float32)

    # ---- residual + post-attn RMSNorm (gain folded into gate/up rows) ----
    h1 = x + o
    h1n = h1 * jax.lax.rsqrt(jnp.mean(h1 * h1, axis=-1, keepdims=True) + EPS)

    # ---- SwiGLU MLP (fused gate/up -> full 128-lane MXU output) ----
    gu = jnp.dot(h1n, w_ref[:, GU_OFF:GU_OFF + 2 * I],
                 preferred_element_type=jnp.float32)           # (N, 2I)
    g = gu[:, 0:I]
    u = gu[:, I:2 * I]
    gated = g * jax.lax.logistic(g) * u                        # SiLU(g) * u
    mlp = jnp.dot(gated, attn_ref[0:I, 0:D],                   # wd, lane offset 0
                  preferred_element_type=jnp.float32)          # (N, D)

    out_ref[...] = h1 + mlp


# ----------------------------- constant packing ------------------------------
def _rope_tables(freqs_cis):
    """freqs_cis: complex64 (S, HD//2) -> cos, sin tables of shape (S, D)."""
    cos_half = jnp.real(freqs_cis).astype(jnp.float32)
    sin_half = jnp.imag(freqs_cis).astype(jnp.float32)
    cos_head = jnp.concatenate([cos_half, cos_half], axis=-1)   # (S, HD)
    sin_head = jnp.concatenate([sin_half, sin_half], axis=-1)
    return jnp.tile(cos_head, (1, H)), jnp.tile(sin_head, (1, H))  # (S, D)


def build_constants(params, freqs_cis, attention_mask):
    """One-time packing of the kernel operands (hoisted out of the call path)."""
    (wq, wk, wv, wo, rms1, rms2, wg, wu, wd) = params
    # The in-kernel rolls by +/-HD//2 rely on sina/sinb being zero exactly on
    # the lanes whose rolled source crosses a head / projection boundary.
    assert D == H * HD and HD % 2 == 0, "RoPE roll/mask construction broken"

    # --- packed weights: [wqkv padded to 128 lanes | gate/up | o-proj] ---
    scale = 1.0 / math.sqrt(HD)                     # softmax scale -> Q columns
    wqkv = jnp.concatenate(
        [wq * scale, wk, wv, jnp.zeros((D, QKVP - 3 * D), jnp.float32)], axis=1)
    wqkv = wqkv * rms1.reshape(D, 1)                # input-RMSNorm gain -> rows
    wgu = jnp.concatenate([wg, wu], axis=1) * rms2.reshape(D, 1)
    w_pack = jnp.concatenate([wqkv, wgu, wo], axis=1)           # (D, WTOT)
    assert w_pack.shape == (D, WTOT)

    # --- RoPE tables widened to the padded QKV lanes (identity on v/pad) ---
    cos_s, sin_s = _rope_tables(freqs_cis)                      # (S, D)
    cos_nd = jnp.tile(cos_s, (B, 1))                            # (N, D)
    sin_nd = jnp.tile(sin_s, (B, 1))
    first_half = (jnp.arange(D) % HD) < (HD // 2)
    sina_nd = jnp.where(first_half[None, :], -sin_nd, 0.0)      # first-half lanes
    sinb_nd = jnp.where(first_half[None, :], 0.0, sin_nd)       # second-half lanes
    ones = jnp.ones((N, QKVP - 2 * D), jnp.float32)
    zeros = jnp.zeros((N, QKVP - 2 * D), jnp.float32)
    cos_w = jnp.concatenate([cos_nd, cos_nd, ones], axis=1)     # (N, 4D)
    sina_w = jnp.concatenate([sina_nd, sina_nd, zeros], axis=1)
    sinb_w = jnp.concatenate([sinb_nd, sinb_nd, zeros], axis=1)
    rope_tab = jnp.concatenate([cos_w, sina_w, sinb_w], axis=0)  # (3N, 4D)

    # --- attention constants: [wd | per-head lane mask | stacked add-mask] ---
    # Block-diagonal additive mask: causal within a batch, -1e9 across batches
    # (this is what makes folding batch into the sublane axis legal).
    # NOTE: assumes the additive mask is shared across batch and heads.
    mask2d = attention_mask.reshape(S, S).astype(jnp.float32)
    same_b = jnp.eye(B, dtype=bool)
    mask_nn = jnp.where(same_b[:, None, :, None], mask2d[None, :, None, :],
                        jnp.float32(-1e9)).reshape(N, N)
    mask_stack = jnp.tile(mask_nn, (H, 1))                      # (H*N, N)
    head_sel = ((jnp.arange(D)[None, :] // HD)
                == jnp.arange(H)[:, None]).astype(jnp.float32)  # (H, D)
    headmask = jnp.repeat(head_sel, N, axis=0)                  # (H*N, D)

    def pad_rows(a):
        return jnp.pad(a, ((0, AROWS - a.shape[0]), (0, 0)))
    attn_tab = jnp.concatenate(
        [pad_rows(wd), pad_rows(headmask), pad_rows(mask_stack)], axis=1)

    return rope_tab, attn_tab, w_pack


# ----------------------------- wrapper ---------------------------------------
@partial(jax.jit, static_argnames=("approx_recip",))
def decoder_layer_pallas(x_flat, rope_tab, attn_tab, w_pack, approx_recip=True):
    vmem = lambda: pl.BlockSpec(memory_space=pltpu.MemorySpace.VMEM)
    return pl.pallas_call(
        partial(decoder_layer_kernel, approx_recip=approx_recip),
        out_shape=jax.ShapeDtypeStruct((N, D), jnp.float32),
        in_specs=[vmem() for _ in range(4)],
        out_specs=vmem(),
    )(x_flat, rope_tab, attn_tab, w_pack)


def decoder_pipeline_layer(consts, inputs):
    """Mirrors DecoderPipelineLayer.forward: takes/returns the 4-tuple."""
    hidden_states, freqs_cis, attention_mask, labels = inputs
    x_flat = hidden_states.astype(jnp.float32).reshape(N, D)
    out = decoder_layer_pallas(x_flat, *consts)
    return (out.reshape(B, S, D), freqs_cis, attention_mask, labels)


# ----------------------------- reference -------------------------------------
def reference_layer(params, x, freqs_cis, attention_mask):
    (wq, wk, wv, wo, rms1, rms2, wg, wu, wd) = params
    cos, sin = _rope_tables(freqs_cis)
    mask = attention_mask.reshape(S, S)

    def rotate_half(t):                                 # (S, D), per-head
        th = t.reshape(S, H, HD)
        r = jnp.concatenate([-th[..., HD // 2:], th[..., :HD // 2]], axis=-1)
        return r.reshape(S, D)

    def one(xb):
        var = jnp.mean(xb * xb, axis=-1, keepdims=True)
        xn = xb * jax.lax.rsqrt(var + EPS) * rms1[0]
        q = xn @ wq
        k = xn @ wk
        v = xn @ wv
        q = q * cos + rotate_half(q) * sin
        k = k * cos + rotate_half(k) * sin
        outs = []
        for h in range(H):
            qh = q[:, h * HD:(h + 1) * HD]
            kh = k[:, h * HD:(h + 1) * HD]
            vh = v[:, h * HD:(h + 1) * HD]
            s = qh @ kh.T / math.sqrt(HD) + mask
            p = jax.nn.softmax(s, axis=-1)
            outs.append(p @ vh)
        attn = jnp.concatenate(outs, axis=-1)
        h1 = xb + attn @ wo
        var2 = jnp.mean(h1 * h1, axis=-1, keepdims=True)
        h1n = h1 * jax.lax.rsqrt(var2 + EPS) * rms2[0]
        g = h1n @ wg
        u = h1n @ wu
        mlp = (jax.nn.silu(g) * u) @ wd
        return h1 + mlp

    return jax.vmap(one)(x)


# ----------------------------- main -------------------------------------------
if __name__ == "__main__":
    key = jax.random.PRNGKey(0)
    ks = jax.random.split(key, 12)

    def init(k, shape, scale):
        return jax.random.normal(k, shape, dtype=jnp.float32) * scale

    wq = init(ks[0], (D, D), 1.0 / math.sqrt(D))
    wk = init(ks[1], (D, D), 1.0 / math.sqrt(D))
    wv = init(ks[2], (D, D), 1.0 / math.sqrt(D))
    wo = init(ks[3], (D, D), 1.0 / math.sqrt(D))
    wg = init(ks[4], (D, I), 1.0 / math.sqrt(D))
    wu = init(ks[5], (D, I), 1.0 / math.sqrt(D))
    wd = init(ks[6], (I, D), 1.0 / math.sqrt(I))
    # Non-trivial RMSNorm gains so the weight-folding path is actually tested.
    rms1 = jnp.ones((1, D), jnp.float32) + 0.1 * jax.random.normal(ks[9], (1, D))
    rms2 = jnp.ones((1, D), jnp.float32) + 0.1 * jax.random.normal(ks[10], (1, D))
    params = (wq, wk, wv, wo, rms1, rms2, wg, wu, wd)

    # inputs mirroring (hidden_states, freqs_cis, attention_mask, labels)
    hidden_states = jax.random.normal(ks[7], (B, S, D), dtype=jnp.float32)
    pos = jnp.arange(S, dtype=jnp.float32)[:, None]
    inv_freq = 1.0 / (10000.0 ** (jnp.arange(0, HD, 2, dtype=jnp.float32) / HD))
    angles = pos * inv_freq[None, :]                          # (S, HD//2)
    freqs_cis = jnp.exp(1j * angles.astype(jnp.complex64))    # complex64 (S, HD//2)
    causal = jnp.tril(jnp.ones((S, S), dtype=bool))
    attention_mask = jnp.where(causal, 0.0, -1e9).astype(jnp.float32)[None, None]
    labels = jax.random.randint(ks[8], (B, S), 0, 100)

    # One-time constant packing (hoisted out of the per-call path).
    consts = build_constants(params, freqs_cis, attention_mask)

    out_tuple = decoder_pipeline_layer(
        consts, (hidden_states, freqs_cis, attention_mask, labels))
    hs_out = jax.block_until_ready(out_tuple[0])

    ref = reference_layer(params, hidden_states, freqs_cis, attention_mask)
    # Tolerance covers the EUP approximate reciprocal in the softmax
    # denominator (pass approx_recip=False for an exact-division test path);
    # everything else is f32.
    np.testing.assert_allclose(np.asarray(hs_out), np.asarray(ref),
                               rtol=1e-2, atol=1e-2)
    assert hs_out.shape == (B, S, D)
    print("KERNEL_OK")
</pallas_src>

<mosaic_0001>
module attributes {stable_mosaic.version = 11 : i64} {
  func.func @decoder_layer_kernel(%arg0: memref<16x32xf32, #tpu.memory_space<vmem>>, %arg1: memref<48x128xf32, #tpu.memory_space<vmem>>, %arg2: memref<64x80xf32, #tpu.memory_space<vmem>>, %arg3: memref<32x288xf32, #tpu.memory_space<vmem>>, %arg4: memref<16x32xf32, #tpu.memory_space<vmem>>) attributes {dimension_semantics = [], scalar_prefetch = 0 : i64, scratch_operands = 0 : i64, tpu.core_type = #tpu.core_type<tc>} {
    %c0 = arith.constant 0 : index
    %c0_0 = arith.constant 0 : index
    %0 = vector.load %arg0[%c0, %c0_0] : memref<16x32xf32, #tpu.memory_space<vmem>>, vector<16x32xf32>
    %1 = arith.mulf %0, %0 : vector<16x32xf32>
    %cst = arith.constant dense<0.000000e+00> : vector<16xf32>
    %2 = vector.multi_reduction <add>, %1, %cst [1] : vector<16x32xf32> to vector<16xf32>
    %3 = vector.shape_cast %2 : vector<16xf32> to vector<16x1xf32>
    %cst_1 = arith.constant 3.200000e+01 : f32
    %4 = vector.broadcast %cst_1 : f32 to vector<16x1xf32>
    %5 = arith.divf %3, %4 : vector<16x1xf32>
    %cst_2 = arith.constant 9.99999997E-7 : f32
    %6 = vector.broadcast %cst_2 : f32 to vector<16x1xf32>
    %7 = arith.addf %5, %6 : vector<16x1xf32>
    %8 = math.rsqrt %7 : vector<16x1xf32>
    %9 = vector.broadcast %8 : vector<16x1xf32> to vector<16x32xf32>
    %10 = arith.mulf %0, %9 : vector<16x32xf32>
    %c0_3 = arith.constant 0 : index
    %c0_4 = arith.constant 0 : index
    %11 = vector.load %arg3[%c0_3, %c0_4] : memref<32x288xf32, #tpu.memory_space<vmem>>, vector<32x128xf32>
    %cst_5 = arith.constant dense<0.000000e+00> : vector<16x128xf32>
    %12 = tpu.matmul %10, %11, %cst_5 {dimension_numbers = #tpu.dot_dimension_numbers<[1], [0], [0], [1], [0, 0, 1, 1], [], []>} : vector<16x32xf32>, vector<32x128xf32>, vector<16x128xf32> -> vector<16x128xf32>
    %c0_6 = arith.constant 0 : index
    %c0_7 = arith.constant 0 : index
    %13 = vector.load %arg1[%c0_6, %c0_7] : memref<48x128xf32, #tpu.memory_space<vmem>>, vector<16x128xf32>
    %c16 = arith.constant 16 : index
    %c0_8 = arith.constant 0 : index
    %14 = vector.load %arg1[%c16, %c0_8] : memref<48x128xf32, #tpu.memory_space<vmem>>, vector<16x128xf32>
    %c32 = arith.constant 32 : index
    %c0_9 = arith.constant 0 : index
    %15 = vector.load %arg1[%c32, %c0_9] : memref<48x128xf32, #tpu.memory_space<vmem>>, vector<16x128xf32>
    %16 = arith.mulf %12, %13 : vector<16x128xf32>
    %c124_i32 = arith.constant 124 : i32
    %17 = tpu.dynamic_rotate %12 by %c124_i32 dim 1 : vector<16x128xf32>, i32 -> vector<16x128xf32>
    %18 = arith.mulf %17, %14 : vector<16x128xf32>
    %19 = arith.addf %16, %18 : vector<16x128xf32>
    %c4_i32 = arith.constant 4 : i32
    %20 = tpu.dynamic_rotate %12 by %c4_i32 dim 1 : vector<16x128xf32>, i32 -> vector<16x128xf32>
    %21 = arith.mulf %20, %15 : vector<16x128xf32>
    %22 = arith.addf %19, %21 : vector<16x128xf32>
    %23 = vector.extract_strided_slice %22 {offsets = [0, 0], sizes = [16, 32], strides = [1, 1]} : vector<16x128xf32> to vector<16x32xf32>
    %24 = vector.extract_strided_slice %22 {offsets = [0, 32], sizes = [16, 32], strides = [1, 1]} : vector<16x128xf32> to vector<16x32xf32>
    %25 = vector.extract_strided_slice %22 {offsets = [0, 64], sizes = [16, 32], strides = [1, 1]} : vector<16x128xf32> to vector<16x32xf32>
    %c0_10 = arith.constant 0 : index
    %c32_11 = arith.constant 32 : index
    %26 = vector.load %arg2[%c0_10, %c32_11] : memref<64x80xf32, #tpu.memory_space<vmem>>, vector<64x32xf32>
    %c0_12 = arith.constant 0 : index
    %c64 = arith.constant 64 : index
    %27 = vector.load %arg2[%c0_12, %c64] : memref<64x80xf32, #tpu.memory_space<vmem>>, vector<64x16xf32>
    %28 = tpu.concatenate %23, %23, %23, %23 in 0 : vector<16x32xf32>, vector<16x32xf32>, vector<16x32xf32>, vector<16x32xf32> -> vector<64x32xf32>
    %29 = arith.mulf %28, %26 : vector<64x32xf32>
    %cst_13 = arith.constant dense<0.000000e+00> : vector<64x16xf32>
    %30 = tpu.matmul %29, %24, %cst_13 {dimension_numbers = #tpu.dot_dimension_numbers<[1], [1], [0], [0], [0, 0, 1, 0], [], []>} : vector<64x32xf32>, vector<16x32xf32>, vector<64x16xf32> -> vector<64x16xf32>
    %31 = arith.addf %30, %27 : vector<64x16xf32>
    %cst_14 = arith.constant dense<0xFF800000> : vector<64xf32>
    %32 = vector.multi_reduction <maximumf>, %31, %cst_14 [1] : vector<64x16xf32> to vector<64xf32>
    %33 = vector.shape_cast %32 : vector<64xf32> to vector<64x1xf32>
    %34 = vector.broadcast %33 : vector<64x1xf32> to vector<64x16xf32>
    %35 = arith.subf %31, %34 : vector<64x16xf32>
    %36 = math.exp %35 : vector<64x16xf32>
    %cst_15 = arith.constant dense<0.000000e+00> : vector<64xf32>
    %37 = vector.multi_reduction <add>, %36, %cst_15 [1] : vector<64x16xf32> to vector<64xf32>
    %38 = vector.shape_cast %37 : vector<64xf32> to vector<64x1xf32>
    %39 = tpu.reciprocal %38 {approx = true} : vector<64x1xf32> -> vector<64x1xf32>
    %40 = vector.broadcast %39 : vector<64x1xf32> to vector<64x16xf32>
    %41 = arith.mulf %36, %40 : vector<64x16xf32>
    %cst_16 = arith.constant dense<0.000000e+00> : vector<64x32xf32>
    %42 = tpu.matmul %41, %25, %cst_16 {dimension_numbers = #tpu.dot_dimension_numbers<[1], [0], [0], [1], [0, 0, 1, 1], [], []>} : vector<64x16xf32>, vector<16x32xf32>, vector<64x32xf32> -> vector<64x32xf32>
    %43 = arith.mulf %42, %26 : vector<64x32xf32>
    %44 = vector.extract_strided_slice %43 {offsets = [0, 0], sizes = [16, 32], strides = [1, 1]} : vector<64x32xf32> to vector<16x32xf32>
    %45 = vector.extract_strided_slice %43 {offsets = [16, 0], sizes = [16, 32], strides = [1, 1]} : vector<64x32xf32> to vector<16x32xf32>
    %46 = arith.addf %44, %45 : vector<16x32xf32>
    %47 = vector.extract_strided_slice %43 {offsets = [32, 0], sizes = [16, 32], strides = [1, 1]} : vector<64x32xf32> to vector<16x32xf32>
    %48 = arith.addf %46, %47 : vector<16x32xf32>
    %49 = vector.extract_strided_slice %43 {offsets = [48, 0], sizes = [16, 32], strides = [1, 1]} : vector<64x32xf32> to vector<16x32xf32>
    %50 = arith.addf %48, %49 : vector<16x32xf32>
    %c0_17 = arith.constant 0 : index
    %c256 = arith.constant 256 : index
    %51 = vector.load %arg3[%c0_17, %c256] : memref<32x288xf32, #tpu.memory_space<vmem>>, vector<32x32xf32>
    %cst_18 = arith.constant dense<0.000000e+00> : vector<16x32xf32>
    %52 = tpu.matmul %50, %51, %cst_18 {dimension_numbers = #tpu.dot_dimension_numbers<[1], [0], [0], [1], [0, 0, 1, 1], [], []>} : vector<16x32xf32>, vector<32x32xf32>, vector<16x32xf32> -> vector<16x32xf32>
    %53 = arith.addf %0, %52 : vector<16x32xf32>
    %54 = arith.mulf %53, %53 : vector<16x32xf32>
    %cst_19 = arith.constant dense<0.000000e+00> : vector<16xf32>
    %55 = vector.multi_reduction <add>, %54, %cst_19 [1] : vector<16x32xf32> to vector<16xf32>
    %56 = vector.shape_cast %55 : vector<16xf32> to vector<16x1xf32>
    %cst_20 = arith.constant 3.200000e+01 : f32
    %57 = vector.broadcast %cst_20 : f32 to vector<16x1xf32>
    %58 = arith.divf %56, %57 : vector<16x1xf32>
    %cst_21 = arith.constant 9.99999997E-7 : f32
    %59 = vector.broadcast %cst_21 : f32 to vector<16x1xf32>
    %60 = arith.addf %58, %59 : vector<16x1xf32>
    %61 = math.rsqrt %60 : vector<16x1xf32>
    %62 = vector.broadcast %61 : vector<16x1xf32> to vector<16x32xf32>
    %63 = arith.mulf %53, %62 : vector<16x32xf32>
    %c0_22 = arith.constant 0 : index
    %c128 = arith.constant 128 : index
    %64 = vector.load %arg3[%c0_22, %c128] : memref<32x288xf32, #tpu.memory_space<vmem>>, vector<32x128xf32>
    %cst_23 = arith.constant dense<0.000000e+00> : vector<16x128xf32>
    %65 = tpu.matmul %63, %64, %cst_23 {dimension_numbers = #tpu.dot_dimension_numbers<[1], [0], [0], [1], [0, 0, 1, 1], [], []>} : vector<16x32xf32>, vector<32x128xf32>, vector<16x128xf32> -> vector<16x128xf32>
    %66 = vector.extract_strided_slice %65 {offsets = [0, 0], sizes = [16, 64], strides = [1, 1]} : vector<16x128xf32> to vector<16x64xf32>
    %67 = vector.extract_strided_slice %65 {offsets = [0, 64], sizes = [16, 64], strides = [1, 1]} : vector<16x128xf32> to vector<16x64xf32>
    %68 = arith.negf %66 : vector<16x64xf32>
    %69 = math.exp %68 : vector<16x64xf32>
    %cst_24 = arith.constant 1.000000e+00 : f32
    %70 = vector.broadcast %cst_24 : f32 to vector<16x64xf32>
    %71 = arith.addf %70, %69 : vector<16x64xf32>
    %72 = arith.divf %70, %71 : vector<16x64xf32>
    %73 = arith.mulf %66, %72 : vector<16x64xf32>
    %74 = arith.mulf %73, %67 : vector<16x64xf32>
    %c0_25 = arith.constant 0 : index
    %c0_26 = arith.constant 0 : index
    %75 = vector.load %arg2[%c0_25, %c0_26] : memref<64x80xf32, #tpu.memory_space<vmem>>, vector<64x32xf32>
    %cst_27 = arith.constant dense<0.000000e+00> : vector<16x32xf32>
    %76 = tpu.matmul %74, %75, %cst_27 {dimension_numbers = #tpu.dot_dimension_numbers<[1], [0], [0], [1], [0, 0, 1, 1], [], []>} : vector<16x64xf32>, vector<64x32xf32>, vector<16x32xf32> -> vector<16x32xf32>
    %77 = arith.addf %53, %76 : vector<16x32xf32>
    %c0_28 = arith.constant 0 : index
    %c0_29 = arith.constant 0 : index
    %78 = vector.load %arg4[%c0_28, %c0_29] : memref<16x32xf32, #tpu.memory_space<vmem>>, vector<16x32xf32>
    tpu.vector_store %arg4[%c0_28, %c0_29], %77 {strides = array<i32>} : memref<16x32xf32, #tpu.memory_space<vmem>>, vector<16x32xf32>,
    return
  }
}

</mosaic_0001>

<llo_original>
// kernel: decoder_layer_pallas.1
$region0: #{decoder_layer_pallas.1}
  #allocation0 [shape = 'u32[]', space=smem, size = 0x4, offset = 0x4, fixed_abs, tag = 'smem constant byte address 0x4 - core index']
  #allocation1 [shape = 'u32[144,128]{1,0:T(1,128)}', space=vmem, size = 0x12000, scoped, tag = 'internal scratch']
  %s0 = inlined_call_operand.hbm [shape: f32[16,32], index: 0, kind: input, shape index: {}]
  %s1 = inlined_call_operand.hbm [shape: f32[48,128], index: 1, kind: input, shape index: {}]
  %s2 = inlined_call_operand.hbm [shape: f32[64,80], index: 2, kind: input, shape index: {}]
  %s3 = inlined_call_operand.hbm [shape: f32[32,288], index: 3, kind: input, shape index: {}]
  %s4 = inlined_call_operand.hbm [shape: f32[16,32], index: 4, kind: output, shape index: {}]
  %s5 = sld [smem:[#allocation0]]
  $region42: #{decoder_layer_pallas.1} parent=0
    _
  %s7 = ssub.s32 1, %s5
  %s8 = scalar_select 0, %s7, %s5
  $region1: #{decoder_layer_pallas.1} parent=0
    #allocation2 [shape = 'u8[8192]{0}', space=vmem, size = 0x2000, scoped, tag = 'input window, operand 0, single buffered']
    #allocation3 [shape = 's32[1]{0}', space=sflag, size = 0x4, scoped, tag = 'scoped memory for decoder_layer_pallas.1']
    #allocation4 [shape = 's32[1]{0}', space=sflag, size = 0x4, scoped, tag = 'scoped memory for decoder_layer_pallas.1']
    #allocation5 [shape = 'u8[24576]{0}', space=vmem, size = 0x6000, scoped, tag = 'input window, operand 1, single buffered']
    #allocation6 [shape = 's32[1]{0}', space=sflag, size = 0x4, scoped, tag = 'scoped memory for decoder_layer_pallas.1']
    #allocation7 [shape = 'u8[32768]{0}', space=vmem, size = 0x8000, scoped, tag = 'input window, operand 2, single buffered']
    #allocation8 [shape = 'u8[49152]{0}', space=vmem, size = 0xc000, scoped, tag = 'input window, operand 3, single buffered']
    #allocation9 [shape = 's32[1]{0}', space=sflag, size = 0x4, scoped, tag = 'scoped memory for decoder_layer_pallas.1']
    #allocation10 [shape = 'u8[8192]{0}', space=vmem, size = 0x2000, scoped, tag = 'output window, operand 0, single buffered']
    %9 = vsyncpa [#allocation3], 0
    %10 = vsyncpa [#allocation6], 0
    %11 = vsyncpa [#allocation9], 0
    %12 = vsyncpa [#allocation4], 0
    // Predicated region
    $region2: #{decoder_layer_pallas.1} parent=1 // pred_check
      _
    $region3: #{decoder_layer_pallas.1} parent=1 // pred_check_branch
      %14 = sbr.rel (0) target = $region5
    $region4: #{decoder_layer_pallas.1} parent=1 // pred_region
      %s16 = ssub.s32 256, 256
      %17 = vsyncadd [#allocation3], %s16
      %s18 = sshll.u32 [#allocation2], 4
      %s19 = int_to_ptr.vmem [resolvable:$true] %s18
      %24 = dma.hbm_to_vmem [thread:$0]  %s0, 256, %s19, [#allocation3], 128, 128, 8
    $region5: #{decoder_layer_pallas.1} parent=1 // pred_fallthru
      _
    // Predicated region
    $region6: #{decoder_layer_pallas.1} parent=1 // pred_check
      _
    $region7: #{decoder_layer_pallas.1} parent=1 // pred_check_branch
      %26 = sbr.rel (0) target = $region9
    $region8: #{decoder_layer_pallas.1} parent=1 // pred_region
      %s28 = ssub.s32 768, 768
      %29 = vsyncadd [#allocation6], %s28
      %s30 = sshll.u32 [#allocation5], 4
      %s31 = int_to_ptr.vmem [resolvable:$true] %s30
      %36 = dma.hbm_to_vmem [thread:$0]  %s1, 768, %s31, [#allocation6], 128, 128, 8
    $region9: #{decoder_layer_pallas.1} parent=1 // pred_fallthru
      _
    // Predicated region
    $region10: #{decoder_layer_pallas.1} parent=1 // pred_check
      _
    $region11: #{decoder_layer_pallas.1} parent=1 // pred_check_branch
      %38 = sbr.rel (0) target = $region13
    $region12: #{decoder_layer_pallas.1} parent=1 // pred_region
      %s40 = ssub.s32 1024, 1024
      %41 = vsyncadd [#allocation6], %s40
      %s42 = sshll.u32 [#allocation7], 4
      %s43 = int_to_ptr.vmem [resolvable:$true] %s42
      %48 = dma.hbm_to_vmem [thread:$0]  %s2, 1024, %s43, [#allocation6], 128, 128, 8
    $region13: #{decoder_layer_pallas.1} parent=1 // pred_fallthru
      _
    // Predicated region
    $region14: #{decoder_layer_pallas.1} parent=1 // pred_check
      _
    $region15: #{decoder_layer_pallas.1} parent=1 // pred_check_branch
      %50 = sbr.rel (0) target = $region17
    $region16: #{decoder_layer_pallas.1} parent=1 // pred_region
      %s52 = ssub.s32 1536, 1536
      %53 = vsyncadd [#allocation9], %s52
      %s54 = sshll.u32 [#allocation8], 4
      %s55 = int_to_ptr.vmem [resolvable:$true] %s54
      %60 = dma.hbm_to_vmem [thread:$0]  %s3, 1536, %s55, [#allocation9], 384, 384, 24
    $region17: #{decoder_layer_pallas.1} parent=1 // pred_fallthru
      _
    // Predicated region
    $region18: #{decoder_layer_pallas.1} parent=1 // pred_check
      _
    $region19: #{decoder_layer_pallas.1} parent=1 // pred_check_branch
      %62 = sbr.rel (0) target = $region21
    $region20: #{decoder_layer_pallas.1} parent=1 // pred_region
      %63 = dma.done [#allocation3], 256
    $region21: #{decoder_layer_pallas.1} parent=1 // pred_fallthru
      _
    // Predicated region
    $region22: #{decoder_layer_pallas.1} parent=1 // pred_check
      _
    $region23: #{decoder_layer_pallas.1} parent=1 // pred_check_branch
      %65 = sbr.rel (0) target = $region25
    $region24: #{decoder_layer_pallas.1} parent=1 // pred_region
      %66 = dma.done [#allocation6], 768
    $region25: #{decoder_layer_pallas.1} parent=1 // pred_fallthru
      _
    // Predicated region
    $region26: #{decoder_layer_pallas.1} parent=1 // pred_check
      _
    $region27: #{decoder_layer_pallas.1} parent=1 // pred_check_branch
      %68 = sbr.rel (0) target = $region29
    $region28: #{decoder_layer_pallas.1} parent=1 // pred_region
      %69 = dma.done [#allocation6], 1024
    $region29: #{decoder_layer_pallas.1} parent=1 // pred_fallthru
      _
    // Predicated region
    $region30: #{decoder_layer_pallas.1} parent=1 // pred_check
      _
    $region31: #{decoder_layer_pallas.1} parent=1 // pred_check_branch
      %71 = sbr.rel (0) target = $region33
    $region32: #{decoder_layer_pallas.1} parent=1 // pred_region
      %72 = dma.done [#allocation9], 1536
    $region33: #{decoder_layer_pallas.1} parent=1 // pred_fallthru
      _
    %v73 = vld [vmem:[#allocation2] sm:$0xff]
    %v74 = vld [vmem:[#allocation2 + $0x8] sm:$0xff]
    %v75 = vmul.f32 %v73, %v73
    %v76 = vmul.f32 %v74, %v74
    %vm77 = vcmask 261120
    %v78 = vsel %vm77, %v75, 0.0
    %79 = vadd.xlane.f32.xlu0 %v78
    %v80 = vpop.xlane.xlu0 %79
    %v81 = vsel %vm77, %v76, 0.0
    %82 = vadd.xlane.f32.xlu0 %v81
    %v83 = vpop.xlane.xlu0 %82
    %v84 = vrcp.pop 32.0
    %v85 = vmul.f32 %v80, %v84
    %v86 = vmul.f32 %v83, %v84
    %v87 = vadd.f32 %v85, 1e-06
    %v88 = vadd.f32 %v86, 1e-06
    %v89 = vrsqrt.pop %v87
    %v90 = vrsqrt.pop %v88
    %v91 = vmul.f32 %v73, %v89
    %v92 = vmul.f32 %v74, %v90
    %v93 = vld [vmem:[#allocation8] sm:$0xff]
    %v94 = vld [vmem:[#allocation8 + $0x18] sm:$0xff]
    %v95 = vld [vmem:[#allocation8 + $0x30] sm:$0xff]
    %v96 = vld [vmem:[#allocation8 + $0x48] sm:$0xff]
    %v98 = vsel %vm77, %v91, 0
    %v101 = vsel %vm77, %v92, 0
    %103 = vmatprep.subr.mxu0 0.0
    %104 = vmatpush1.msra.mxu0 %v93
    %105 = vmatprep.subr.mxu0 0.0
    %106 = vmatpush1.msra.mxu0 %v94
    %107 = vmatprep.subr.mxu0 0.0
    %108 = vmatpush1.msra.mxu0 %v95
    %109 = vmatprep.subr.mxu0 0.0
    %110 = vmatpush1.msra.mxu0 %v96
    %111 = vmatprep.subr.mxu0 0.0
    %112 = vmatpush1.msra.mxu0 0.0
    %113 = vmatprep.subr.mxu0 0.0
    %114 = vmatpush1.msra.mxu0 0.0
    %115 = vmatprep.subr.mxu0 0.0
    %116 = vmatpush1.msra.mxu0 0.0
    %117 = vmatprep.subr.mxu0 0.0
    %118 = vmatpush1.msra.mxu0 0.0
    %119 = vmatprep.subr.mxu0 0.0
    %120 = vmatpush1.msra.mxu0 0.0
    %121 = vmatprep.subr.mxu0 0.0
    %122 = vmatpush1.msra.mxu0 0.0
    %123 = vmatprep.subr.mxu0 0.0
    %124 = vmatpush1.msra.mxu0 0.0
    %125 = vmatprep.subr.mxu0 0.0
    %126 = vmatpush1.msra.mxu0 0.0
    %127 = vmatprep.subr.mxu0 0.0
    %128 = vmatpush1.msra.mxu0 0.0
    %129 = vmatprep.subr.mxu0 0.0
    %130 = vmatpush1.msra.mxu0 0.0
    %131 = vmatprep.subr.mxu0 0.0
    %132 = vmatpush1.msra.mxu0 0.0
    %133 = vmatprep.subr.mxu0 0.0
    %134 = vmatpush1.msra.mxu0 0.0
    %135 = vmatprep.subr.mxu0 0.0
    %136 = vmatpush1.msra.mxu0 0.0
    %137 = vmatprep.subr.mxu0 0.0
    %138 = vmatpush1.msra.mxu0 0.0
    %139 = vmatprep.subr.mxu0 0.0
    %140 = vmatpush1.msra.mxu0 0.0
    %141 = vmatprep.subr.mxu0 0.0
    %142 = vmatpush1.msra.mxu0 0.0
    %143 = vmatprep.subr.mxu0 0.0
    %144 = vmatpush1.msra.mxu0 0.0
    %145 = vmatprep.subr.mxu0 0.0
    %146 = vmatpush1.msra.mxu0 0.0
    %147 = vmatprep.subr.mxu0 0.0
    %148 = vmatpush1.msra.mxu0 0.0
    %149 = vmatprep.subr.mxu0 0.0
    %150 = vmatpush1.msra.mxu0 0.0
    %151 = vmatprep.subr.mxu0 0.0
    %152 = vmatpush1.msra.mxu0 0.0
    %153 = vmatprep.subr.mxu0 0.0
    %154 = vmatpush1.msra.mxu0 0.0
    %155 = vmatprep.subr.mxu0 0.0
    %156 = vmatpush1.msra.mxu0 0.0
    %157 = vmatprep.subr.mxu0 0.0
    %158 = vmatpush1.msra.mxu0 0.0
    %159 = vmatprep.subr.mxu0 0.0
    %160 = vmatpush1.msra.mxu0 0.0
    %161 = vmatprep.subr.mxu0 0.0
    %162 = vmatpush1.msra.mxu0 0.0
    %163 = vmatprep.subr.mxu0 0.0
    %164 = vmatpush1.msra.mxu0 0.0
    %165 = vmatprep.subr.mxu0 0.0
    %166 = vmatpush1.msra.mxu0 0.0
    %167 = vmatprep.mubr.f32.mxu0 0.0
    %168 = vmatmul.mubr.f32.gmra.mrb[0].mxu0 %v98
    %v169 = vpop.f32.mrb[0].mxu0
    %v170 = vadd.f32 0.0, %v169
    %v171 = vpop.f32.mrb[0].mxu0
    %172 = vmatprep.mubr.f32.mxu0 0.0
    %173 = vmatmul.mubr.f32.gmra.mrb[0].mxu0 %v101
    %v174 = vpop.f32.mrb[0].mxu0
    %v175 = vadd.f32 0.0, %v174
    %v176 = vpop.f32.mrb[0].mxu0
    %177 = vdwg.mxu0
    %v178 = vld [vmem:[#allocation5] sm:$0xff]
    %v179 = vld [vmem:[#allocation5 + $0x8] sm:$0xff]
    %v180 = vld [vmem:[#allocation5 + $0x10] sm:$0xff]
    %v181 = vld [vmem:[#allocation5 + $0x18] sm:$0xff]
    %v182 = vld [vmem:[#allocation5 + $0x20] sm:$0xff]
    %v183 = vld [vmem:[#allocation5 + $0x28] sm:$0xff]
    %v184 = vmul.f32 %v170, %v178
    %v185 = vmul.f32 %v175, %v179
    %186 = vrot.lane.b32.xlu0 %v170, 124
    %v187 = vpop.permute.xlu0 %186
    %188 = vrot.lane.b32.xlu0 %v175, 124
    %v189 = vpop.permute.xlu0 %188
    %v190 = vmul.f32 %v187, %v180
    %v191 = vmul.f32 %v189, %v181
    %v192 = vadd.f32 %v184, %v190
    %v193 = vadd.f32 %v185, %v191
    %194 = vrot.lane.b32.xlu0 %v170, 4
    %v195 = vpop.permute.xlu0 %194
    %196 = vrot.lane.b32.xlu0 %v175, 4
    %v197 = vpop.permute.xlu0 %196
    %v198 = vmul.f32 %v195, %v182
    %v199 = vmul.f32 %v197, %v183
    %v200 = vadd.f32 %v192, %v198
    %v201 = vadd.f32 %v193, %v199
    %v202 = vld [vmem:[#allocation7] sm:$0xff]
    %v203 = vld [vmem:[#allocation7 + $0x8] sm:$0xff]
    %v204 = vld [vmem:[#allocation7 + $0x10] sm:$0xff]
    %v205 = vld [vmem:[#allocation7 + $0x18] sm:$0xff]
    %v206 = vld [vmem:[#allocation7 + $0x20] sm:$0xff]
    %v207 = vld [vmem:[#allocation7 + $0x28] sm:$0xff]
    %v208 = vld [vmem:[#allocation7 + $0x30] sm:$0xff]
    %v209 = vld [vmem:[#allocation7 + $0x38] sm:$0xff]
    %218 = vrot.lane.b32.xlu0 %v202, 96
    %v219 = vpop.permute.xlu0 %218
    %220 = vrot.lane.b32.xlu0 %v203, 96
    %v221 = vpop.permute.xlu0 %220
    %222 = vrot.lane.b32.xlu0 %v204, 96
    %v223 = vpop.permute.xlu0 %222
    %224 = vrot.lane.b32.xlu0 %v205, 96
    %v225 = vpop.permute.xlu0 %224
    %226 = vrot.lane.b32.xlu0 %v206, 96
    %v227 = vpop.permute.xlu0 %226
    %228 = vrot.lane.b32.xlu0 %v207, 96
    %v229 = vpop.permute.xlu0 %228
    %230 = vrot.lane.b32.xlu0 %v208, 96
    %v231 = vpop.permute.xlu0 %230
    %232 = vrot.lane.b32.xlu0 %v209, 96
    %v233 = vpop.permute.xlu0 %232
    %v242 = vmul.f32 %v200, %v219
    %v243 = vmul.f32 %v201, %v221
    %v244 = vmul.f32 %v200, %v223
    %v245 = vmul.f32 %v201, %v225
    %v246 = vmul.f32 %v200, %v227
    %v247 = vmul.f32 %v201, %v229
    %v248 = vmul.f32 %v200, %v231
    %v249 = vmul.f32 %v201, %v233
    %252 = vrot.lane.b32.xlu0 %v200, 96
    %v253 = vpop.permute.xlu0 %252
    %254 = vrot.lane.b32.xlu0 %v201, 96
    %v255 = vpop.permute.xlu0 %254
    %256 = vrot.lane.b32.xlu0 %v202, 64
    %v257 = vpop.permute.xlu0 %256
    %258 = vrot.lane.b32.xlu0 %v203, 64
    %v259 = vpop.permute.xlu0 %258
    %260 = vrot.lane.b32.xlu0 %v204, 64
    %v261 = vpop.permute.xlu0 %260
    %262 = vrot.lane.b32.xlu0 %v205, 64
    %v263 = vpop.permute.xlu0 %262
    %264 = vrot.lane.b32.xlu0 %v206, 64
    %v265 = vpop.permute.xlu0 %264
    %266 = vrot.lane.b32.xlu0 %v207, 64
    %v267 = vpop.permute.xlu0 %266
    %268 = vrot.lane.b32.xlu0 %v208, 64
    %v269 = vpop.permute.xlu0 %268
    %270 = vrot.lane.b32.xlu0 %v209, 64
    %v271 = vpop.permute.xlu0 %270
    %v281 = vsel %vm77, %v242, 0
    %v284 = vsel %vm77, %v243, 0
    %v287 = vsel %vm77, %v244, 0
    %v290 = vsel %vm77, %v245, 0
    %v293 = vsel %vm77, %v246, 0
    %v296 = vsel %vm77, %v247, 0
    %v299 = vsel %vm77, %v248, 0
    %v302 = vsel %vm77, %v249, 0
    %v304 = vsel %vm77, %v253, 0
    %v306 = vsel %vm77, %v255, 0
    %308 = vmatprep.subr.mxu0 0.0
    %309 = vmatpush1.xpose.msra.mxu0 %v304
    %310 = vmatprep.subr.mxu0 0.0
    %311 = vmatpush1.xpose.msra.mxu0 %v306
    %312 = vmatprep.subr.mxu0 0.0
    %313 = vmatpush1.xpose.msra.mxu0 0.0
    %314 = vmatprep.subr.mxu0 0.0
    %315 = vmatpush1.xpose.msra.mxu0 0.0
    %316 = vmatprep.subr.mxu0 0.0
    %317 = vmatpush1.xpose.msra.mxu0 0.0
    %318 = vmatprep.subr.mxu0 0.0
    %319 = vmatpush1.xpose.msra.mxu0 0.0
    %320 = vmatprep.subr.mxu0 0.0
    %321 = vmatpush1.xpose.msra.mxu0 0.0
    %322 = vmatprep.subr.mxu0 0.0
    %323 = vmatpush1.xpose.msra.mxu0 0.0
    %324 = vmatprep.subr.mxu0 0.0
    %325 = vmatpush1.xpose.msra.mxu0 0.0
    %326 = vmatprep.subr.mxu0 0.0
    %327 = vmatpush1.xpose.msra.mxu0 0.0
    %328 = vmatprep.subr.mxu0 0.0
    %329 = vmatpush1.xpose.msra.mxu0 0.0
    %330 = vmatprep.subr.mxu0 0.0
    %331 = vmatpush1.xpose.msra.mxu0 0.0
    %332 = vmatprep.subr.mxu0 0.0
    %333 = vmatpush1.xpose.msra.mxu0 0.0
    %334 = vmatprep.subr.mxu0 0.0
    %335 = vmatpush1.xpose.msra.mxu0 0.0
    %336 = vmatprep.subr.mxu0 0.0
    %337 = vmatpush1.xpose.msra.mxu0 0.0
    %338 = vmatprep.subr.mxu0 0.0
    %339 = vmatpush1.xpose.msra.mxu0 0.0
    %340 = vmatprep.subr.mxu0 0.0
    %341 = vmatpush1.xpose.msra.mxu0 0.0
    %342 = vmatprep.subr.mxu0 0.0
    %343 = vmatpush1.xpose.msra.mxu0 0.0
    %344 = vmatprep.subr.mxu0 0.0
    %345 = vmatpush1.xpose.msra.mxu0 0.0
    %346 = vmatprep.subr.mxu0 0.0
    %347 = vmatpush1.xpose.msra.mxu0 0.0
    %348 = vmatprep.subr.mxu0 0.0
    %349 = vmatpush1.xpose.msra.mxu0 0.0
    %350 = vmatprep.subr.mxu0 0.0
    %351 = vmatpush1.xpose.msra.mxu0 0.0
    %352 = vmatprep.subr.mxu0 0.0
    %353 = vmatpush1.xpose.msra.mxu0 0.0
    %354 = vmatprep.subr.mxu0 0.0
    %355 = vmatpush1.xpose.msra.mxu0 0.0
    %356 = vmatprep.subr.mxu0 0.0
    %357 = vmatpush1.xpose.msra.mxu0 0.0
    %358 = vmatprep.subr.mxu0 0.0
    %359 = vmatpush1.xpose.msra.mxu0 0.0
    %360 = vmatprep.subr.mxu0 0.0
    %361 = vmatpush1.xpose.msra.mxu0 0.0
    %362 = vmatprep.subr.mxu0 0.0
    %363 = vmatpush1.xpose.msra.mxu0 0.0
    %364 = vmatprep.subr.mxu0 0.0
    %365 = vmatpush1.xpose.msra.mxu0 0.0
    %366 = vmatprep.subr.mxu0 0.0
    %367 = vmatpush1.xpose.msra.mxu0 0.0
    %368 = vmatprep.subr.mxu0 0.0
    %369 = vmatpush1.xpose.msra.mxu0 0.0
    %370 = vmatprep.subr.mxu0 0.0
    %371 = vmatpush1.xpose.msra.mxu0 0.0
    %372 = vmatprep.mubr.f32.mxu0 0.0
    %373 = vmatmul.mubr.f32.gmra.mrb[0].mxu0 %v281
    %v374 = vpop.f32.mrb[0].mxu0
    %v375 = vadd.f32 %v257, %v374
    %v376 = vpop.f32.mrb[0].mxu0
    %377 = vmatprep.mubr.f32.mxu0 0.0
    %378 = vmatmul.mubr.f32.gmra.mrb[0].mxu0 %v284
    %v379 = vpop.f32.mrb[0].mxu0
    %v380 = vadd.f32 %v259, %v379
    %v381 = vpop.f32.mrb[0].mxu0
    %382 = vmatprep.mubr.f32.mxu0 0.0
    %383 = vmatmul.mubr.f32.gmra.mrb[0].mxu0 %v287
    %v384 = vpop.f32.mrb[0].mxu0
    %v385 = vadd.f32 %v261, %v384
    %v386 = vpop.f32.mrb[0].mxu0
    %387 = vmatprep.mubr.f32.mxu0 0.0
    %388 = vmatmul.mubr.f32.gmra.mrb[0].mxu0 %v290
    %v389 = vpop.f32.mrb[0].mxu0
    %v390 = vadd.f32 %v263, %v389
    %v391 = vpop.f32.mrb[0].mxu0
    %392 = vmatprep.mubr.f32.mxu0 0.0
    %393 = vmatmul.mubr.f32.gmra.mrb[0].mxu0 %v293
    %v394 = vpop.f32.mrb[0].mxu0
    %v395 = vadd.f32 %v265, %v394
    %v396 = vpop.f32.mrb[0].mxu0
    %397 = vmatprep.mubr.f32.mxu0 0.0
    %398 = vmatmul.mubr.f32.gmra.mrb[0].mxu0 %v296
    %v399 = vpop.f32.mrb[0].mxu0
    %v400 = vadd.f32 %v267, %v399
    %v401 = vpop.f32.mrb[0].mxu0
    %402 = vmatprep.mubr.f32.mxu0 0.0
    %403 = vmatmul.mubr.f32.gmra.mrb[0].mxu0 %v299
    %v404 = vpop.f32.mrb[0].mxu0
    %v405 = vadd.f32 %v269, %v404
    %v406 = vpop.f32.mrb[0].mxu0
    %407 = vmatprep.mubr.f32.mxu0 0.0
    %408 = vmatmul.mubr.f32.gmra.mrb[0].mxu0 %v302
    %v409 = vpop.f32.mrb[0].mxu0
    %v410 = vadd.f32 %v271, %v409
    %v411 = vpop.f32.mrb[0].mxu0
    %412 = vdwg.mxu0
    %vm413 = vcmask 130048
    %v414 = vsel %vm413, %v375, -inf
    %415 = vmax.xlane.f32.xlu0 %v414
    %v416 = vpop.xlane.xlu0 %415
    %v417 = vsel %vm413, %v380, -inf
    %418 = vmax.xlane.f32.xlu0 %v417
    %v419 = vpop.xlane.xlu0 %418
    %v420 = vsel %vm413, %v385, -inf
    %421 = vmax.xlane.f32.xlu0 %v420
    %v422 = vpop.xlane.xlu0 %421
    %v423 = vsel %vm413, %v390, -inf
    %424 = vmax.xlane.f32.xlu0 %v423
    %v425 = vpop.xlane.xlu0 %424
    %v426 = vsel %vm413, %v395, -inf
    %427 = vmax.xlane.f32.xlu0 %v426
    %v428 = vpop.xlane.xlu0 %427
    %v429 = vsel %vm413, %v400, -inf
    %430 = vmax.xlane.f32.xlu0 %v429
    %v431 = vpop.xlane.xlu0 %430
    %v432 = vsel %vm413, %v405, -inf
    %433 = vmax.xlane.f32.xlu0 %v432
    %v434 = vpop.xlane.xlu0 %433
    %v435 = vsel %vm413, %v410, -inf
    %436 = vmax.xlane.f32.xlu0 %v435
    %v437 = vpop.xlane.xlu0 %436
    %v438 = vsub.f32 %v375, %v416
    %v439 = vsub.f32 %v380, %v419
    %v440 = vsub.f32 %v385, %v422
    %v441 = vsub.f32 %v390, %v425
    %v442 = vsub.f32 %v395, %v428
    %v443 = vsub.f32 %v400, %v431
    %v444 = vsub.f32 %v405, %v434
    %v445 = vsub.f32 %v410, %v437
    %v446 = vmul.f32 %v438, 1.442695
    %v447 = vpow.pop %v446
    %v448 = vmul.f32 %v439, 1.442695
    %v449 = vpow.pop %v448
    %v450 = vmul.f32 %v440, 1.442695
    %v451 = vpow.pop %v450
    %v452 = vmul.f32 %v441, 1.442695
    %v453 = vpow.pop %v452
    %v454 = vmul.f32 %v442, 1.442695
    %v455 = vpow.pop %v454
    %v456 = vmul.f32 %v443, 1.442695
    %v457 = vpow.pop %v456
    %v458 = vmul.f32 %v444, 1.442695
    %v459 = vpow.pop %v458
    %v460 = vmul.f32 %v445, 1.442695
    %v461 = vpow.pop %v460
    %v462 = vsel %vm413, %v447, 0.0
    %463 = vadd.xlane.f32.xlu0 %v462
    %v464 = vpop.xlane.xlu0 %463
    %v465 = vsel %vm413, %v449, 0.0
    %466 = vadd.xlane.f32.xlu0 %v465
    %v467 = vpop.xlane.xlu0 %466
    %v468 = vsel %vm413, %v451, 0.0
    %469 = vadd.xlane.f32.xlu0 %v468
    %v470 = vpop.xlane.xlu0 %469
    %v471 = vsel %vm413, %v453, 0.0
    %472 = vadd.xlane.f32.xlu0 %v471
    %v473 = vpop.xlane.xlu0 %472
    %v474 = vsel %vm413, %v455, 0.0
    %475 = vadd.xlane.f32.xlu0 %v474
    %v476 = vpop.xlane.xlu0 %475
    %v477 = vsel %vm413, %v457, 0.0
    %478 = vadd.xlane.f32.xlu0 %v477
    %v479 = vpop.xlane.xlu0 %478
    %v480 = vsel %vm413, %v459, 0.0
    %481 = vadd.xlane.f32.xlu0 %v480
    %v482 = vpop.xlane.xlu0 %481
    %v483 = vsel %vm413, %v461, 0.0
    %484 = vadd.xlane.f32.xlu0 %v483
    %v485 = vpop.xlane.xlu0 %484
    %v486 = vrcp.pop %v464
    %v487 = vrcp.pop %v467
    %v488 = vrcp.pop %v470
    %v489 = vrcp.pop %v473
    %v490 = vrcp.pop %v476
    %v491 = vrcp.pop %v479
    %v492 = vrcp.pop %v482
    %v493 = vrcp.pop %v485
    %v494 = vmul.f32 %v447, %v486
    %v495 = vmul.f32 %v449, %v487
    %v496 = vmul.f32 %v451, %v488
    %v497 = vmul.f32 %v453, %v489
    %v498 = vmul.f32 %v455, %v490
    %v499 = vmul.f32 %v457, %v491
    %v500 = vmul.f32 %v459, %v492
    %v501 = vmul.f32 %v461, %v493
    %502 = vrot.lane.b32.xlu0 %v200, 64
    %v503 = vpop.permute.xlu0 %502
    %504 = vrot.lane.b32.xlu0 %v201, 64
    %v505 = vpop.permute.xlu0 %504
    %v509 = vsel %vm413, %v494, 0
    %v512 = vsel %vm413, %v495, 0
    %v515 = vsel %vm413, %v496, 0
    %v518 = vsel %vm413, %v497, 0
    %v521 = vsel %vm413, %v498, 0
    %v524 = vsel %vm413, %v499, 0
    %v527 = vsel %vm413, %v500, 0
    %v530 = vsel %vm413, %v501, 0
    %532 = vmatprep.subr.mxu0 0.0
    %533 = vmatpush1.msra.mxu0 %v503
    %534 = vmatprep.subr.mxu0 0.0
    %535 = vmatpush1.msra.mxu0 %v505
    %536 = vmatprep.subr.mxu0 0.0
    %537 = vmatpush1.msra.mxu0 0.0
    %538 = vmatprep.subr.mxu0 0.0
    %539 = vmatpush1.msra.mxu0 0.0
    %540 = vmatprep.subr.mxu0 0.0
    %541 = vmatpush1.msra.mxu0 0.0
    %542 = vmatprep.subr.mxu0 0.0
    %543 = vmatpush1.msra.mxu0 0.0
    %544 = vmatprep.subr.mxu0 0.0
    %545 = vmatpush1.msra.mxu0 0.0
    %546 = vmatprep.subr.mxu0 0.0
    %547 = vmatpush1.msra.mxu0 0.0
    %548 = vmatprep.subr.mxu0 0.0
    %549 = vmatpush1.msra.mxu0 0.0
    %550 = vmatprep.subr.mxu0 0.0
    %551 = vmatpush1.msra.mxu0 0.0
    %552 = vmatprep.subr.mxu0 0.0
    %553 = vmatpush1.msra.mxu0 0.0
    %554 = vmatprep.subr.mxu0 0.0
    %555 = vmatpush1.msra.mxu0 0.0
    %556 = vmatprep.subr.mxu0 0.0
    %557 = vmatpush1.msra.mxu0 0.0
    %558 = vmatprep.subr.mxu0 0.0
    %559 = vmatpush1.msra.mxu0 0.0
    %560 = vmatprep.subr.mxu0 0.0
    %561 = vmatpush1.msra.mxu0 0.0
    %562 = vmatprep.subr.mxu0 0.0
    %563 = vmatpush1.msra.mxu0 0.0
    %564 = vmatprep.subr.mxu0 0.0
    %565 = vmatpush1.msra.mxu0 0.0
    %566 = vmatprep.subr.mxu0 0.0
    %567 = vmatpush1.msra.mxu0 0.0
    %568 = vmatprep.subr.mxu0 0.0
    %569 = vmatpush1.msra.mxu0 0.0
    %570 = vmatprep.subr.mxu0 0.0
    %571 = vmatpush1.msra.mxu0 0.0
    %572 = vmatprep.subr.mxu0 0.0
    %573 = vmatpush1.msra.mxu0 0.0
    %574 = vmatprep.subr.mxu0 0.0
    %575 = vmatpush1.msra.mxu0 0.0
    %576 = vmatprep.subr.mxu0 0.0
    %577 = vmatpush1.msra.mxu0 0.0
    %578 = vmatprep.subr.mxu0 0.0
    %579 = vmatpush1.msra.mxu0 0.0
    %580 = vmatprep.subr.mxu0 0.0
    %581 = vmatpush1.msra.mxu0 0.0
    %582 = vmatprep.subr.mxu0 0.0
    %583 = vmatpush1.msra.mxu0 0.0
    %584 = vmatprep.subr.mxu0 0.0
    %585 = vmatpush1.msra.mxu0 0.0
    %586 = vmatprep.subr.mxu0 0.0
    %587 = vmatpush1.msra.mxu0 0.0
    %588 = vmatprep.subr.mxu0 0.0
    %589 = vmatpush1.msra.mxu0 0.0
    %590 = vmatprep.subr.mxu0 0.0
    %591 = vmatpush1.msra.mxu0 0.0
    %592 = vmatprep.subr.mxu0 0.0
    %593 = vmatpush1.msra.mxu0 0.0
    %594 = vmatprep.subr.mxu0 0.0
    %595 = vmatpush1.msra.mxu0 0.0
    %596 = vmatprep.mubr.f32.mxu0 0.0
    %597 = vmatmul.mubr.f32.gmra.mrb[0].mxu0 %v509
    %v598 = vpop.f32.mrb[0].mxu0
    %v599 = vadd.f32 0.0, %v598
    %v600 = vpop.f32.mrb[0].mxu0
    %601 = vmatprep.mubr.f32.mxu0 0.0
    %602 = vmatmul.mubr.f32.gmra.mrb[0].mxu0 %v512
    %v603 = vpop.f32.mrb[0].mxu0
    %v604 = vadd.f32 0.0, %v603
    %v605 = vpop.f32.mrb[0].mxu0
    %606 = vmatprep.mubr.f32.mxu0 0.0
    %607 = vmatmul.mubr.f32.gmra.mrb[0].mxu0 %v515
    %v608 = vpop.f32.mrb[0].mxu0
    %v609 = vadd.f32 0.0, %v608
    %v610 = vpop.f32.mrb[0].mxu0
    %611 = vmatprep.mubr.f32.mxu0 0.0
    %612 = vmatmul.mubr.f32.gmra.mrb[0].mxu0 %v518
    %v613 = vpop.f32.mrb[0].mxu0
    %v614 = vadd.f32 0.0, %v613
    %v615 = vpop.f32.mrb[0].mxu0
    %616 = vmatprep.mubr.f32.mxu0 0.0
    %617 = vmatmul.mubr.f32.gmra.mrb[0].mxu0 %v521
    %v618 = vpop.f32.mrb[0].mxu0
    %v619 = vadd.f32 0.0, %v618
    %v620 = vpop.f32.mrb[0].mxu0
    %621 = vmatprep.mubr.f32.mxu0 0.0
    %622 = vmatmul.mubr.f32.gmra.mrb[0].mxu0 %v524
    %v623 = vpop.f32.mrb[0].mxu0
    %v624 = vadd.f32 0.0, %v623
    %v625 = vpop.f32.mrb[0].mxu0
    %626 = vmatprep.mubr.f32.mxu0 0.0
    %627 = vmatmul.mubr.f32.gmra.mrb[0].mxu0 %v527
    %v628 = vpop.f32.mrb[0].mxu0
    %v629 = vadd.f32 0.0, %v628
    %v630 = vpop.f32.mrb[0].mxu0
    %631 = vmatprep.mubr.f32.mxu0 0.0
    %632 = vmatmul.mubr.f32.gmra.mrb[0].mxu0 %v530
    %v633 = vpop.f32.mrb[0].mxu0
    %v634 = vadd.f32 0.0, %v633
    %v635 = vpop.f32.mrb[0].mxu0
    %636 = vdwg.mxu0
    %v637 = vmul.f32 %v599, %v219
    %v638 = vmul.f32 %v604, %v221
    %v639 = vmul.f32 %v609, %v223
    %v640 = vmul.f32 %v614, %v225
    %v641 = vmul.f32 %v619, %v227
    %v642 = vmul.f32 %v624, %v229
    %v643 = vmul.f32 %v629, %v231
    %v644 = vmul.f32 %v634, %v233
    %v645 = vadd.f32 %v637, %v639
    %v646 = vadd.f32 %v638, %v640
    %v647 = vadd.f32 %v645, %v641
    %v648 = vadd.f32 %v646, %v642
    %v649 = vadd.f32 %v647, %v643
    %v650 = vadd.f32 %v648, %v644
    %v651 = vld [vmem:[#allocation8 + $0x10] sm:$0xff]
    %v652 = vld [vmem:[#allocation8 + $0x28] sm:$0xff]
    %v653 = vld [vmem:[#allocation8 + $0x40] sm:$0xff]
    %v654 = vld [vmem:[#allocation8 + $0x58] sm:$0xff]
    %v656 = vsel %vm77, %v649, 0
    %v659 = vsel %vm77, %v650, 0
    %661 = vmatprep.subr.mxu0 0.0
    %662 = vmatpush1.msra.mxu0 %v651
    %663 = vmatprep.subr.mxu0 0.0
    %664 = vmatpush1.msra.mxu0 %v652
    %665 = vmatprep.subr.mxu0 0.0
    %666 = vmatpush1.msra.mxu0 %v653
    %667 = vmatprep.subr.mxu0 0.0
    %668 = vmatpush1.msra.mxu0 %v654
    %669 = vmatprep.subr.mxu0 0.0
    %670 = vmatpush1.msra.mxu0 0.0
    %671 = vmatprep.subr.mxu0 0.0
    %672 = vmatpush1.msra.mxu0 0.0
    %673 = vmatprep.subr.mxu0 0.0
    %674 = vmatpush1.msra.mxu0 0.0
    %675 = vmatprep.subr.mxu0 0.0
    %676 = vmatpush1.msra.mxu0 0.0
    %677 = vmatprep.subr.mxu0 0.0
    %678 = vmatpush1.msra.mxu0 0.0
    %679 = vmatprep.subr.mxu0 0.0
    %680 = vmatpush1.msra.mxu0 0.0
    %681 = vmatprep.subr.mxu0 0.0
    %682 = vmatpush1.msra.mxu0 0.0
    %683 = vmatprep.subr.mxu0 0.0
    %684 = vmatpush1.msra.mxu0 0.0
    %685 = vmatprep.subr.mxu0 0.0
    %686 = vmatpush1.msra.mxu0 0.0
    %687 = vmatprep.subr.mxu0 0.0
    %688 = vmatpush1.msra.mxu0 0.0
    %689 = vmatprep.subr.mxu0 0.0
    %690 = vmatpush1.msra.mxu0 0.0
    %691 = vmatprep.subr.mxu0 0.0
    %692 = vmatpush1.msra.mxu0 0.0
    %693 = vmatprep.subr.mxu0 0.0
    %694 = vmatpush1.msra.mxu0 0.0
    %695 = vmatprep.subr.mxu0 0.0
    %696 = vmatpush1.msra.mxu0 0.0
    %697 = vmatprep.subr.mxu0 0.0
    %698 = vmatpush1.msra.mxu0 0.0
    %699 = vmatprep.subr.mxu0 0.0
    %700 = vmatpush1.msra.mxu0 0.0
    %701 = vmatprep.subr.mxu0 0.0
    %702 = vmatpush1.msra.mxu0 0.0
    %703 = vmatprep.subr.mxu0 0.0
    %704 = vmatpush1.msra.mxu0 0.0
    %705 = vmatprep.subr.mxu0 0.0
    %706 = vmatpush1.msra.mxu0 0.0
    %707 = vmatprep.subr.mxu0 0.0
    %708 = vmatpush1.msra.mxu0 0.0
    %709 = vmatprep.subr.mxu0 0.0
    %710 = vmatpush1.msra.mxu0 0.0
    %711 = vmatprep.subr.mxu0 0.0
    %712 = vmatpush1.msra.mxu0 0.0
    %713 = vmatprep.subr.mxu0 0.0
    %714 = vmatpush1.msra.mxu0 0.0
    %715 = vmatprep.subr.mxu0 0.0
    %716 = vmatpush1.msra.mxu0 0.0
    %717 = vmatprep.subr.mxu0 0.0
    %718 = vmatpush1.msra.mxu0 0.0
    %719 = vmatprep.subr.mxu0 0.0
    %720 = vmatpush1.msra.mxu0 0.0
    %721 = vmatprep.subr.mxu0 0.0
    %722 = vmatpush1.msra.mxu0 0.0
    %723 = vmatprep.subr.mxu0 0.0
    %724 = vmatpush1.msra.mxu0 0.0
    %725 = vmatprep.mubr.f32.mxu0 0.0
    %726 = vmatmul.mubr.f32.gmra.mrb[0].mxu0 %v656
    %v727 = vpop.f32.mrb[0].mxu0
    %v728 = vadd.f32 0.0, %v727
    %v729 = vpop.f32.mrb[0].mxu0
    %730 = vmatprep.mubr.f32.mxu0 0.0
    %731 = vmatmul.mubr.f32.gmra.mrb[0].mxu0 %v659
    %v732 = vpop.f32.mrb[0].mxu0
    %v733 = vadd.f32 0.0, %v732
    %v734 = vpop.f32.mrb[0].mxu0
    %735 = vdwg.mxu0
    %v736 = vadd.f32 %v73, %v728
    %v737 = vadd.f32 %v74, %v733
    %v738 = vmul.f32 %v736, %v736
    %v739 = vmul.f32 %v737, %v737
    %v740 = vsel %vm77, %v738, 0.0
    %741 = vadd.xlane.f32.xlu0 %v740
    %v742 = vpop.xlane.xlu0 %741
    %v743 = vsel %vm77, %v739, 0.0
    %744 = vadd.xlane.f32.xlu0 %v743
    %v745 = vpop.xlane.xlu0 %744
    %v746 = vmul.f32 %v742, %v84
    %v747 = vmul.f32 %v745, %v84
    %v748 = vadd.f32 %v746, 1e-06
    %v749 = vadd.f32 %v747, 1e-06
    %v750 = vrsqrt.pop %v748
    %v751 = vrsqrt.pop %v749
    %v752 = vmul.f32 %v736, %v750
    %v753 = vmul.f32 %v737, %v751
    %v754 = vld [vmem:[#allocation8 + $0x8] sm:$0xff]
    %v755 = vld [vmem:[#allocation8 + $0x20] sm:$0xff]
    %v756 = vld [vmem:[#allocation8 + $0x38] sm:$0xff]
    %v757 = vld [vmem:[#allocation8 + $0x50] sm:$0xff]
    %v759 = vsel %vm77, %v752, 0
    %v762 = vsel %vm77, %v753, 0
    %764 = vmatprep.subr.mxu0 0.0
    %765 = vmatpush1.msra.mxu0 %v754
    %766 = vmatprep.subr.mxu0 0.0
    %767 = vmatpush1.msra.mxu0 %v755
    %768 = vmatprep.subr.mxu0 0.0
    %769 = vmatpush1.msra.mxu0 %v756
    %770 = vmatprep.subr.mxu0 0.0
    %771 = vmatpush1.msra.mxu0 %v757
    %772 = vmatprep.subr.mxu0 0.0
    %773 = vmatpush1.msra.mxu0 0.0
    %774 = vmatprep.subr.mxu0 0.0
    %775 = vmatpush1.msra.mxu0 0.0
    %776 = vmatprep.subr.mxu0 0.0
    %777 = vmatpush1.msra.mxu0 0.0
    %778 = vmatprep.subr.mxu0 0.0
    %779 = vmatpush1.msra.mxu0 0.0
    %780 = vmatprep.subr.mxu0 0.0
    %781 = vmatpush1.msra.mxu0 0.0
    %782 = vmatprep.subr.mxu0 0.0
    %783 = vmatpush1.msra.mxu0 0.0
    %784 = vmatprep.subr.mxu0 0.0
    %785 = vmatpush1.msra.mxu0 0.0
    %786 = vmatprep.subr.mxu0 0.0
    %787 = vmatpush1.msra.mxu0 0.0
    %788 = vmatprep.subr.mxu0 0.0
    %789 = vmatpush1.msra.mxu0 0.0
    %790 = vmatprep.subr.mxu0 0.0
    %791 = vmatpush1.msra.mxu0 0.0
    %792 = vmatprep.subr.mxu0 0.0
    %793 = vmatpush1.msra.mxu0 0.0
    %794 = vmatprep.subr.mxu0 0.0
    %795 = vmatpush1.msra.mxu0 0.0
    %796 = vmatprep.subr.mxu0 0.0
    %797 = vmatpush1.msra.mxu0 0.0
    %798 = vmatprep.subr.mxu0 0.0
    %799 = vmatpush1.msra.mxu0 0.0
    %800 = vmatprep.subr.mxu0 0.0
    %801 = vmatpush1.msra.mxu0 0.0
    %802 = vmatprep.subr.mxu0 0.0
    %803 = vmatpush1.msra.mxu0 0.0
    %804 = vmatprep.subr.mxu0 0.0
    %805 = vmatpush1.msra.mxu0 0.0
    %806 = vmatprep.subr.mxu0 0.0
    %807 = vmatpush1.msra.mxu0 0.0
    %808 = vmatprep.subr.mxu0 0.0
    %809 = vmatpush1.msra.mxu0 0.0
    %810 = vmatprep.subr.mxu0 0.0
    %811 = vmatpush1.msra.mxu0 0.0
    %812 = vmatprep.subr.mxu0 0.0
    %813 = vmatpush1.msra.mxu0 0.0
    %814 = vmatprep.subr.mxu0 0.0
    %815 = vmatpush1.msra.mxu0 0.0
    %816 = vmatprep.subr.mxu0 0.0
    %817 = vmatpush1.msra.mxu0 0.0
    %818 = vmatprep.subr.mxu0 0.0
    %819 = vmatpush1.msra.mxu0 0.0
    %820 = vmatprep.subr.mxu0 0.0
    %821 = vmatpush1.msra.mxu0 0.0
    %822 = vmatprep.subr.mxu0 0.0
    %823 = vmatpush1.msra.mxu0 0.0
    %824 = vmatprep.subr.mxu0 0.0
    %825 = vmatpush1.msra.mxu0 0.0
    %826 = vmatprep.subr.mxu0 0.0
    %827 = vmatpush1.msra.mxu0 0.0
    %828 = vmatprep.mubr.f32.mxu0 0.0
    %829 = vmatmul.mubr.f32.gmra.mrb[0].mxu0 %v759
    %v830 = vpop.f32.mrb[0].mxu0
    %v831 = vadd.f32 0.0, %v830
    %v832 = vpop.f32.mrb[0].mxu0
    %833 = vmatprep.mubr.f32.mxu0 0.0
    %834 = vmatmul.mubr.f32.gmra.mrb[0].mxu0 %v762
    %v835 = vpop.f32.mrb[0].mxu0
    %v836 = vadd.f32 0.0, %v835
    %v837 = vpop.f32.mrb[0].mxu0
    %838 = vdwg.mxu0
    %v839 = vxor.u32 %v831, 2147483648
    %v840 = vxor.u32 %v836, 2147483648
    %v841 = vmul.f32 %v839, 1.442695
    %v842 = vpow.pop %v841
    %v843 = vmul.f32 %v840, 1.442695
    %v844 = vpow.pop %v843
    %v845 = vadd.f32 %v842, 1.0
    %v846 = vadd.f32 %v844, 1.0
    %v847 = vrcp.pop %v845
    %v848 = vmul.f32 1.0, %v847
    %v849 = vrcp.pop %v846
    %v850 = vmul.f32 1.0, %v849
    %v851 = vmul.f32 %v831, %v848
    %v852 = vmul.f32 %v836, %v850
    %855 = vrot.lane.b32.xlu0 %v831, 64
    %v856 = vpop.permute.xlu0 %855
    %857 = vrot.lane.b32.xlu0 %v836, 64
    %v858 = vpop.permute.xlu0 %857
    %v861 = vmul.f32 %v851, %v856
    %v862 = vmul.f32 %v852, %v858
    %vm863 = vcmask 523264
    %v865 = vsel %vm863, %v861, 0
    %v868 = vsel %vm863, %v862, 0
    %870 = vmatprep.subr.mxu0 0.0
    %871 = vmatpush1.msra.mxu0 %v202
    %872 = vmatprep.subr.mxu0 0.0
    %873 = vmatpush1.msra.mxu0 %v203
    %874 = vmatprep.subr.mxu0 0.0
    %875 = vmatpush1.msra.mxu0 %v204
    %876 = vmatprep.subr.mxu0 0.0
    %877 = vmatpush1.msra.mxu0 %v205
    %878 = vmatprep.subr.mxu0 0.0
    %879 = vmatpush1.msra.mxu0 %v206
    %880 = vmatprep.subr.mxu0 0.0
    %881 = vmatpush1.msra.mxu0 %v207
    %882 = vmatprep.subr.mxu0 0.0
    %883 = vmatpush1.msra.mxu0 %v208
    %884 = vmatprep.subr.mxu0 0.0
    %885 = vmatpush1.msra.mxu0 %v209
    %886 = vmatprep.subr.mxu0 0.0
    %887 = vmatpush1.msra.mxu0 0.0
    %888 = vmatprep.subr.mxu0 0.0
    %889 = vmatpush1.msra.mxu0 0.0
    %890 = vmatprep.subr.mxu0 0.0
    %891 = vmatpush1.msra.mxu0 0.0
    %892 = vmatprep.subr.mxu0 0.0
    %893 = vmatpush1.msra.mxu0 0.0
    %894 = vmatprep.subr.mxu0 0.0
    %895 = vmatpush1.msra.mxu0 0.0
    %896 = vmatprep.subr.mxu0 0.0
    %897 = vmatpush1.msra.mxu0 0.0
    %898 = vmatprep.subr.mxu0 0.0
    %899 = vmatpush1.msra.mxu0 0.0
    %900 = vmatprep.subr.mxu0 0.0
    %901 = vmatpush1.msra.mxu0 0.0
    %902 = vmatprep.subr.mxu0 0.0
    %903 = vmatpush1.msra.mxu0 0.0
    %904 = vmatprep.subr.mxu0 0.0
    %905 = vmatpush1.msra.mxu0 0.0
    %906 = vmatprep.subr.mxu0 0.0
    %907 = vmatpush1.msra.mxu0 0.0
    %908 = vmatprep.subr.mxu0 0.0
    %909 = vmatpush1.msra.mxu0 0.0
    %910 = vmatprep.subr.mxu0 0.0
    %911 = vmatpush1.msra.mxu0 0.0
    %912 = vmatprep.subr.mxu0 0.0
    %913 = vmatpush1.msra.mxu0 0.0
    %914 = vmatprep.subr.mxu0 0.0
    %915 = vmatpush1.msra.mxu0 0.0
    %916 = vmatprep.subr.mxu0 0.0
    %917 = vmatpush1.msra.mxu0 0.0
    %918 = vmatprep.subr.mxu0 0.0
    %919 = vmatpush1.msra.mxu0 0.0
    %920 = vmatprep.subr.mxu0 0.0
    %921 = vmatpush1.msra.mxu0 0.0
    %922 = vmatprep.subr.mxu0 0.0
    %923 = vmatpush1.msra.mxu0 0.0
    %924 = vmatprep.subr.mxu0 0.0
    %925 = vmatpush1.msra.mxu0 0.0
    %926 = vmatprep.subr.mxu0 0.0
    %927 = vmatpush1.msra.mxu0 0.0
    %928 = vmatprep.subr.mxu0 0.0
    %929 = vmatpush1.msra.mxu0 0.0
    %930 = vmatprep.subr.mxu0 0.0
    %931 = vmatpush1.msra.mxu0 0.0
    %932 = vmatprep.subr.mxu0 0.0
    %933 = vmatpush1.msra.mxu0 0.0
    %934 = vmatprep.mubr.f32.mxu0 0.0
    %935 = vmatmul.mubr.f32.gmra.mrb[0].mxu0 %v865
    %v936 = vpop.f32.mrb[0].mxu0
    %v937 = vadd.f32 0.0, %v936
    %v938 = vpop.f32.mrb[0].mxu0
    %939 = vmatprep.mubr.f32.mxu0 0.0
    %940 = vmatmul.mubr.f32.gmra.mrb[0].mxu0 %v868
    %v941 = vpop.f32.mrb[0].mxu0
    %v942 = vadd.f32 0.0, %v941
    %v943 = vpop.f32.mrb[0].mxu0
    %944 = vdwg.mxu0
    %v945 = vadd.f32 %v736, %v937
    %v946 = vadd.f32 %v737, %v942
    %947 = vst.msk [vmem:[#allocation10] sm:$0xff] %vm77, %v945
    %948 = vst.msk [vmem:[#allocation10 + $0x8] sm:$0xff] %vm77, %v946
    // Predicated region
    $region34: #{decoder_layer_pallas.1} parent=1 // pred_check
      _
    $region35: #{decoder_layer_pallas.1} parent=1 // pred_check_branch
      %950 = sbr.rel (0) target = $region37
    $region36: #{decoder_layer_pallas.1} parent=1 // pred_region
      %s952 = ssub.s32 256, 256
      %953 = vsyncadd [#allocation4], %s952
      %s954 = sshll.u32 [#allocation10], 4
      %s955 = int_to_ptr.vmem [resolvable:$true] %s954
      %960 = dma.vmem_to_hbm [thread:$0]  %s955, 256, %s4, [#allocation4], 128, 128, 8
    $region37: #{decoder_layer_pallas.1} parent=1 // pred_fallthru
      _
    // Predicated region
    $region38: #{decoder_layer_pallas.1} parent=1 // pred_check
      _
    $region39: #{decoder_layer_pallas.1} parent=1 // pred_check_branch
      %962 = sbr.rel (0) target = $region41
    $region40: #{decoder_layer_pallas.1} parent=1 // pred_region
      %963 = dma.done [#allocation4], 256
    $region41: #{decoder_layer_pallas.1} parent=1 // pred_fallthru
      _
    %964 = vsyncpa [#allocation3], 1
    %965 = vsyncpa [#allocation6], 1
    %966 = vsyncpa [#allocation9], 1
    %967 = vsyncpa [#allocation4], 1

</llo_original>
